<compile_context>
chip_gen: v7x
topology: tpu7x:2x2x1
jax: 0.10.0
libtpu: 0.0.40
codegen_flags: <defaults>
</compile_context>

<pallas_src>
import math

import jax
import jax.numpy as jnp
from jax.experimental import pallas as pl
from jax.experimental.pallas import tpu as pltpu


# ----------------------------------------------------------------------------
# PE table construction (matches the PyTorch __init__ loop exactly).
# ----------------------------------------------------------------------------
def _build_pe_table(sequence_len: int, d_model: int) -> jnp.ndarray:
    """Sinusoidal PE table, shape (sequence_len, d_model). Handles odd d_model."""
    position = jnp.arange(sequence_len, dtype=jnp.float32)[:, None]      # (S, 1)
    factor = -math.log(10000.0) / d_model
    even_i = jnp.arange(0, d_model, 2, dtype=jnp.float32)                # ceil(D/2)
    div_term = jnp.exp(even_i * factor)                                  # (ceil(D/2),)
    angles = position * div_term                                         # (S, ceil(D/2))
    pe = jnp.zeros((sequence_len, d_model), dtype=jnp.float32)
    pe = pe.at[:, 0::2].set(jnp.sin(angles))
    # cos goes only into columns i+1 < d_model -> floor(D/2) columns.
    pe = pe.at[:, 1::2].set(jnp.cos(angles)[:, : d_model // 2])
    return pe


# ----------------------------------------------------------------------------
# Kernel: 3D broadcast add, accumulate in f32, store in output dtype.
# ----------------------------------------------------------------------------
def _add_pe_kernel(x_ref, pe_ref, o_ref):
    # x_ref: (tb, ts, D) streamed tile; pe_ref: (ts, D) float32 PE tile.
    x = x_ref[...].astype(jnp.float32)
    pe = pe_ref[...]
    o_ref[...] = (x + pe[None, :, :]).astype(o_ref.dtype)


# ----------------------------------------------------------------------------
# Wrapper.
# ----------------------------------------------------------------------------
_SMALL_BYTES = 4 * 1024 * 1024   # below this, plain JAX add (XLA fuses it)


def _round_up(a: int, b: int) -> int:
    return ((a + b - 1) // b) * b


def _vmem_capacity_bytes() -> int:
    try:
        return int(pltpu.get_tpu_info().vmem_capacity_bytes)
    except Exception:
        return 64 * 1024 * 1024   # conservative (v7x-sized) fallback


def positional_encoding_forward(x: jnp.ndarray,
                                pe_table: jnp.ndarray,
                                *,
                                force_pallas: bool = False,
                                block_bytes: int | None = None) -> jnp.ndarray:
    """out = x + pe_table[None, :, :]   with x of shape (B, S, D)."""
    B, S, D = x.shape
    assert pe_table.shape == (S, D), (
        f"x has (S, D)=({S}, {D}) but PE table is {pe_table.shape}; the module "
        "requires x's seq/d_model to match the registered buffer.")

    pe = pe_table.astype(jnp.float32)          # keep PE in f32 (precision)
    itemsize = jnp.dtype(x.dtype).itemsize
    total_bytes = x.size * itemsize

    if (not force_pallas) and total_bytes <= _SMALL_BYTES:
        # Launch overhead / lost fusion would dwarf the work; let XLA fuse it.
        # NOTE: output dtype follows x.dtype (PyTorch would promote bf16+f32).
        return (x.astype(jnp.float32) + pe[None, :, :]).astype(x.dtype)

    sublane = {4: 8, 2: 16, 1: 32}.get(itemsize, 8)
    d_pad = _round_up(D, 128)                  # lane padding for VMEM footprint

    vmem_cap = _vmem_capacity_bytes()
    if block_bytes is None:
        # Generation-aware target: ~8 MiB on 64 MiB-VMEM parts (v7x),
        # ~16 MiB on 128 MiB parts (v5e/v6e).  Keeps per-step overhead <~5%.
        block_bytes = (8 * 1024 * 1024 if vmem_cap <= 64 * 1024 * 1024
                       else 16 * 1024 * 1024)

    # "rows" = (batch, seq) positions; each row occupies d_pad lanes in VMEM.
    row_bytes = max(d_pad * itemsize, 1)
    budget_rows = max(1, block_bytes // row_bytes)

    if budget_rows >= S:
        # Full sequence per block; tile the batch.
        ts = S
        tb = max(1, min(B, budget_rows // S))
    else:
        # Tile the sequence; one batch element per block.
        tb = 1
        ts = max(sublane, (budget_rows // sublane) * sublane)
        ts = min(ts, S)                        # ts is a sublane multiple or == S

    ns = pl.cdiv(S, ts)
    nb = pl.cdiv(B, tb)

    # v7x has 2 TensorCores: make sure a "parallel" axis has >= 2 programs.
    if ns * nb < 2:
        if B >= 2:
            tb = (B + 1) // 2
            nb = pl.cdiv(B, tb)
        elif S > sublane:
            ts = _round_up((S + 1) // 2, sublane)    # multiple of sublane, < S
            ns = pl.cdiv(S, ts)

    # VMEM budget: double-buffered x-in and out tiles + double-buffered,
    # sublane/lane-padded PE tile + slack for Mosaic internal scratch.
    ts_pad_x = ts if ts == S else _round_up(ts, sublane)
    x_blk = tb * _round_up(ts_pad_x, sublane) * d_pad * itemsize
    pe_blk = _round_up(ts, 8) * d_pad * 4
    vmem_needed = 2 * (2 * x_blk) + 2 * pe_blk + (2 << 20)
    vmem_limit = int(min(max(vmem_needed, 32 << 20),
                         max(vmem_cap - (8 << 20), 32 << 20)))

    cost = pl.CostEstimate(
        flops=B * S * D,
        transcendentals=0,
        bytes_accessed=2 * B * S * D * itemsize + S * D * 4,  # x rd + out wr + pe
    )

    if ns == 1:
        # PE table fully resident; 1-D parallel grid over batch tiles.
        grid = (nb,)
        in_specs = [
            pl.BlockSpec((tb, S, D), lambda b: (b, 0, 0)),
            pl.BlockSpec((S, D), lambda b: (0, 0)),
        ]
        out_spec = pl.BlockSpec((tb, S, D), lambda b: (b, 0, 0))
        dims = ("parallel",)
    else:
        # Sequence tiled: seq outer (PE block index constant across the inner
        # batch loop -> PE streamed exactly once), batch inner.
        grid = (ns, nb)
        in_specs = [
            pl.BlockSpec((tb, ts, D), lambda s, b: (b, s, 0)),
            pl.BlockSpec((ts, D), lambda s, b: (s, 0)),
        ]
        out_spec = pl.BlockSpec((tb, ts, D), lambda s, b: (b, s, 0))
        dims = ("parallel", "parallel")

    return pl.pallas_call(
        _add_pe_kernel,
        out_shape=jax.ShapeDtypeStruct((B, S, D), x.dtype),
        grid_spec=pltpu.PrefetchScalarGridSpec(
            num_scalar_prefetch=0,
            grid=grid,
            in_specs=in_specs,
            out_specs=out_spec,
        ),
        compiler_params=pltpu.CompilerParams(
            dimension_semantics=dims,
            vmem_limit_bytes=vmem_limit,
        ),
        cost_estimate=cost,
    )(x, pe)


# ----------------------------------------------------------------------------
# Self-test.
# ----------------------------------------------------------------------------
if __name__ == "__main__":
    key = jax.random.PRNGKey(0)
    k1, k2, k3, k4, k5 = jax.random.split(key, 5)

    # Case 1: module defaults (sequence_len=6, d_model=9 -- odd d_model).
    B1, S1, D1 = 2, 6, 9
    pe1 = _build_pe_table(S1, D1)
    x1 = jax.random.normal(k1, (B1, S1, D1), dtype=jnp.float32)
    ref1 = x1 + pe1[None, :, :]
    out1_small = jax.block_until_ready(positional_encoding_forward(x1, pe1))
    out1_pallas = jax.block_until_ready(
        positional_encoding_forward(x1, pe1, force_pallas=True))
    assert out1_small.shape == (B1, S1, D1)
    assert jnp.allclose(out1_small, ref1, atol=1e-6), "small-path mismatch"
    assert jnp.allclose(out1_pallas, ref1, atol=1e-6), "pallas-path mismatch (odd D)"

    # Case 2: force sequence tiling with ragged edges (2-D grid, ts < S).
    B2, S2, D2 = 3, 40, 9
    pe2 = _build_pe_table(S2, D2)
    x2 = jax.random.normal(k2, (B2, S2, D2), dtype=jnp.float32)
    out2 = jax.block_until_ready(
        positional_encoding_forward(x2, pe2, force_pallas=True, block_bytes=8 * 1024))
    ref2 = x2 + pe2[None, :, :]
    assert jnp.allclose(out2, ref2, atol=1e-6), "pallas-path mismatch (seq tiling)"

    # Case 3: bf16 input (f32 accumulate, bf16 store).
    B3, S3, D3 = 4, 32, 16
    pe3 = _build_pe_table(S3, D3)
    x3 = jax.random.normal(k3, (B3, S3, D3), dtype=jnp.float32).astype(jnp.bfloat16)
    out3 = jax.block_until_ready(
        positional_encoding_forward(x3, pe3, force_pallas=True))
    ref3 = (x3.astype(jnp.float32) + pe3[None, :, :]).astype(jnp.bfloat16)
    assert out3.dtype == jnp.bfloat16
    assert jnp.allclose(out3.astype(jnp.float32), ref3.astype(jnp.float32),
                        atol=1e-2), "pallas-path mismatch (bf16)"

    # Case 4: lane-wide f32, small forced block (batch-tiled, 2-program grid).
    B4, S4, D4 = 2, 128, 256
    pe4 = _build_pe_table(S4, D4)
    x4 = jax.random.normal(k4, (B4, S4, D4), dtype=jnp.float32)
    out4 = jax.block_until_ready(
        positional_encoding_forward(x4, pe4, force_pallas=True,
                                    block_bytes=256 * 1024))
    ref4 = x4 + pe4[None, :, :]
    assert jnp.allclose(out4, ref4, atol=1e-6), "pallas-path mismatch (wide D)"

    # Case 5: ragged batch tiling (B=5 split into 2 batch tiles).
    B5, S5, D5 = 5, 16, 128
    pe5 = _build_pe_table(S5, D5)
    x5 = jax.random.normal(k5, (B5, S5, D5), dtype=jnp.float32)
    out5 = jax.block_until_ready(
        positional_encoding_forward(x5, pe5, force_pallas=True))
    ref5 = x5 + pe5[None, :, :]
    assert jnp.allclose(out5, ref5, atol=1e-6), "pallas-path mismatch (ragged B)"

    print("KERNEL_OK")
</pallas_src>

<mosaic_0001>
module attributes {stable_mosaic.version = 11 : i64} {
  func.func @_add_pe_kernel(%arg0: i32, %arg1: memref<1x6x9xf32, #tpu.memory_space<vmem>>, %arg2: memref<6x9xf32, #tpu.memory_space<vmem>>, %arg3: memref<1x6x9xf32, #tpu.memory_space<vmem>>) attributes {dimension_semantics = [#tpu.dimension_semantics<parallel>], iteration_bounds = array<i64: 2>, scalar_prefetch = 0 : i64, scratch_operands = 0 : i64, tpu.core_type = #tpu.core_type<tc>, window_params = [{transform_indices = @transform_0, window_bounds = array<i64: 1, 6, 9>}, {pipeline_mode = #tpu.pipeline_mode<synchronous>, transform_indices = @transform_1, window_bounds = array<i64: 6, 9>}, {transform_indices = @transform_2, window_bounds = array<i64: 1, 6, 9>}]} {
    %c0 = arith.constant 0 : index
    %c0_0 = arith.constant 0 : index
    %c0_1 = arith.constant 0 : index
    %0 = vector.load %arg1[%c0, %c0_0, %c0_1] : memref<1x6x9xf32, #tpu.memory_space<vmem>>, vector<1x6x9xf32>
    %c0_2 = arith.constant 0 : index
    %c0_3 = arith.constant 0 : index
    %1 = vector.load %arg2[%c0_2, %c0_3] : memref<6x9xf32, #tpu.memory_space<vmem>>, vector<6x9xf32>
    %2 = vector.shape_cast %1 : vector<6x9xf32> to vector<1x6x9xf32>
    %3 = arith.addf %0, %2 : vector<1x6x9xf32>
    %c0_4 = arith.constant 0 : index
    %c0_5 = arith.constant 0 : index
    %c0_6 = arith.constant 0 : index
    %4 = vector.load %arg3[%c0_4, %c0_5, %c0_6] : memref<1x6x9xf32, #tpu.memory_space<vmem>>, vector<1x6x9xf32>
    tpu.vector_store %arg3[%c0_4, %c0_5, %c0_6], %3 {strides = array<i32>} : memref<1x6x9xf32, #tpu.memory_space<vmem>>, vector<1x6x9xf32>,
    return
  }
  func.func @transform_0(%arg0: i32) -> (i32, i32, i32) {
    %c0_i32 = arith.constant 0 : i32
    %c0_i32_0 = arith.constant 0 : i32
    %c0_i32_1 = arith.constant 0 : i32
    return %arg0, %c0_i32, %c0_i32_0 : i32, i32, i32
  }
  func.func @transform_1(%arg0: i32) -> (i32, i32) {
    %c0_i32 = arith.constant 0 : i32
    %c0_i32_0 = arith.constant 0 : i32
    %c0_i32_1 = arith.constant 0 : i32
    return %c0_i32, %c0_i32_0 : i32, i32
  }
  func.func @transform_2(%arg0: i32) -> (i32, i32, i32) {
    %c0_i32 = arith.constant 0 : i32
    %c0_i32_0 = arith.constant 0 : i32
    %c0_i32_1 = arith.constant 0 : i32
    return %arg0, %c0_i32, %c0_i32_0 : i32, i32, i32
  }
}

</mosaic_0001>

<llo_original>
// kernel: tpu_custom_call.1
$region0: #{tpu_custom_call.1}
  #allocation0 [shape = 'u32[]', space=smem, size = 0x4, offset = 0x4, fixed_abs, tag = 'smem constant byte address 0x4 - core index']
  #allocation1 [shape = 'u32[144,128]{1,0:T(1,128)}', space=vmem, size = 0x12000, scoped, tag = 'internal scratch']
  %s0 = inlined_call_operand.vmem [shape: f32[2,6,9], index: 0, kind: input, shape index: {}]
  %s1 = inlined_call_operand.vmem [shape: f32[6,9], index: 1, kind: input, shape index: {}]
  %s2 = inlined_call_operand.vmem [shape: f32[2,6,9], index: 2, kind: output, shape index: {}]
  %s3 = sld [smem:[#allocation0]]
  $region41: #{tpu_custom_call.1} parent=0
    _
  %s5 = ssub.s32 1, %s3
  %s6 = scalar_select 0, %s5, %s3
  loop: start=0, step=1, limit=4
  $region2: #{tpu_custom_call.1} parent=0 // loop_pre_header
    _
  $region3: #{tpu_custom_call.1} parent=0 // loop_header
    %s8 = sphi 0, %s12
    %p9 = scmp.ge.s32.totalorder %s8, 4
    %s18 = sphi 0, %s20
    %s21 = sphi 0, %s18
    %s22 = sphi 0, %s21
    %s38 = sphi 0, %s22
    %s42 = sphi 0, %s42
    %s44 = sphi 0, %s42
    %s45 = sphi 0, %s44
    %s59 = sphi 0, %s45
    %s65 = sphi 0, %s67
    %s68 = sphi 0, %s65
    %s69 = sphi 0, %s68
    %s85 = sphi 0, %s69
  $region4: #{tpu_custom_call.1} parent=0 // loop_header_branch
    %11 = sbr.rel (%p9) target = $region8
  $region5: #{tpu_custom_call.1} parent=0 // loop_body
    %s13 = ssub.s32 %s8, 1
    %s14 = ssub.s32 %s8, 2
    %s15 = sadd.s32 %s8, 1
    %s16 = ssub.s32 %s8, %s15
    %p17 = scmp.eq.s32.totalorder %s16, 0
    %s19 = sadd.s32 %s18, 1
    %s20 = scalar_select %p17, %s18, %s19
    %p23 = pneg %p17
    %p24 = scmp.eq.s32.totalorder %s8, 1
    %p25 = por %p23, %p24
    %p26 = scmp.ne.s32.totalorder %s18, %s21
    %p27 = scmp.eq.s32.totalorder %s8, 0
    %p28 = por %p26, %p27
    %p29 = scmp.ne.s32.totalorder %s18, %s21
    %p30 = scmp.eq.s32.totalorder %s13, 1
    %p31 = por %p29, %p30
    %p32 = scmp.ne.s32.totalorder %s21, %s22
    %p33 = scmp.eq.s32.totalorder %s13, 0
    %p34 = por %p32, %p33
    %p35 = scmp.ne.s32.totalorder %s21, %s22
    %p36 = scmp.eq.s32.totalorder %s14, 1
    %p37 = por %p35, %p36
    %p39 = scmp.ne.s32.totalorder %s22, %s38
    %p40 = scmp.eq.s32.totalorder %s14, 0
    %p41 = por %p39, %p40
    %s43 = sadd.s32 %s42, 1
    %p46 = scmp.eq.s32.totalorder %s8, 1
    %p47 = scmp.ne.s32.totalorder %s42, %s44
    %p48 = scmp.eq.s32.totalorder %s8, 0
    %p49 = por %p47, %p48
    %p50 = scmp.ne.s32.totalorder %s42, %s44
    %p51 = scmp.eq.s32.totalorder %s13, 1
    %p52 = por %p50, %p51
    %p53 = scmp.ne.s32.totalorder %s44, %s45
    %p54 = scmp.eq.s32.totalorder %s13, 0
    %p55 = por %p53, %p54
    %p56 = scmp.ne.s32.totalorder %s44, %s45
    %p57 = scmp.eq.s32.totalorder %s14, 1
    %p58 = por %p56, %p57
    %p60 = scmp.ne.s32.totalorder %s45, %s59
    %p61 = scmp.eq.s32.totalorder %s14, 0
    %p62 = por %p60, %p61
    %s63 = ssub.s32 %s8, %s15
    %p64 = scmp.eq.s32.totalorder %s63, 0
    %s66 = sadd.s32 %s65, 1
    %s67 = scalar_select %p64, %s65, %s66
    %p70 = pneg %p64
    %p71 = scmp.eq.s32.totalorder %s8, 1
    %p72 = por %p70, %p71
    %p73 = scmp.ne.s32.totalorder %s65, %s68
    %p74 = scmp.eq.s32.totalorder %s8, 0
    %p75 = por %p73, %p74
    %p76 = scmp.ne.s32.totalorder %s65, %s68
    %p77 = scmp.eq.s32.totalorder %s13, 1
    %p78 = por %p76, %p77
    %p79 = scmp.ne.s32.totalorder %s68, %s69
    %p80 = scmp.eq.s32.totalorder %s13, 0
    %p81 = por %p79, %p80
    %p82 = scmp.ne.s32.totalorder %s68, %s69
    %p83 = scmp.eq.s32.totalorder %s14, 1
    %p84 = por %p82, %p83
    %p86 = scmp.ne.s32.totalorder %s69, %s85
    %p87 = scmp.eq.s32.totalorder %s14, 0
    %p88 = por %p86, %p87
    %p89 = scmp.le.s32.totalorder 1, %s8
    %p90 = scmp.lt.s32.totalorder %s8, 3
    %p91 = pnand %p89, %p90
    %p92 = pneg %p91
    // Predicated region
    $region9: #{tpu_custom_call.1} parent=5 // pred_check
      _
    $region10: #{tpu_custom_call.1} parent=5 // pred_check_branch
      %94 = sbr.rel (%p91) target = $region12
    $region11: #{tpu_custom_call.1} parent=5 // pred_region
      %s95 = ssub.s32 %s8, 1
      // Predicated region
      $region13: #{tpu_custom_call.1} parent=11 // pred_check
        %p96 = pneg %p55
      $region14: #{tpu_custom_call.1} parent=11 // pred_check_branch
        %98 = sbr.rel (%p96) target = $region16
      $region15: #{tpu_custom_call.1} parent=11 // pred_region
        _
      $region16: #{tpu_custom_call.1} parent=11 // pred_fallthru
        _
    $region12: #{tpu_custom_call.1} parent=5 // pred_fallthru
      _
    %p99 = scmp.lt.s32.totalorder %s8, 2
    // Predicated region
    $region17: #{tpu_custom_call.1} parent=5 // pred_check
      %p100 = pneg %p99
    $region18: #{tpu_custom_call.1} parent=5 // pred_check_branch
      %102 = sbr.rel (%p100) target = $region20
    $region19: #{tpu_custom_call.1} parent=5 // pred_region
      // Predicated region
      $region21: #{tpu_custom_call.1} parent=19 // pred_check
        %p103 = pneg %p28
      $region22: #{tpu_custom_call.1} parent=19 // pred_check_branch
        %105 = sbr.rel (%p103) target = $region24
      $region23: #{tpu_custom_call.1} parent=19 // pred_region
        %p106 = scmp.lt.s32.totalorder %s8, 1
        %s107 = scalar_select %p106, %s8, 1
        %s108 = smul.addr %s107, 8
        %s109 = scalar_lea.vmem %s0, %s108
      $region24: #{tpu_custom_call.1} parent=19 // pred_fallthru
        _
    $region20: #{tpu_custom_call.1} parent=5 // pred_fallthru
      _
    %p110 = scmp.le.s32.totalorder 1, %s8
    %p111 = scmp.lt.s32.totalorder %s8, 3
    %p112 = pnand %p110, %p111
    %p113 = pneg %p112
    // Predicated region
    $region25: #{tpu_custom_call.1} parent=5 // pred_check
      _
    $region26: #{tpu_custom_call.1} parent=5 // pred_check_branch
      %115 = sbr.rel (%p112) target = $region28
    $region27: #{tpu_custom_call.1} parent=5 // pred_region
      %s116 = ssub.s32 %s8, 1
      %p117 = scmp.lt.s32.totalorder %s13, 1
      %s118 = scalar_select %p117, %s13, 1
      %s119 = smul.addr %s118, 8
      %s120 = scalar_lea.vmem %s0, %s119
      %p121 = pneg %p34
      %p122 = pneg %p31
      %p123 = pneg %p55
      %p124 = pneg %p52
      %p125 = pneg %p81
      %p126 = pneg %p78
      %p127 = scmp.lt.s32.totalorder %s13, 1
      %s128 = scalar_select %p127, %s13, 1
      %s129 = smul.addr %s128, 8
      %s130 = scalar_lea.vmem %s2, %s129
      %p131 = scmp.lt.s32.totalorder %s13, 1
      %s132 = scalar_select %p131, %s13, 1
      %s133 = smul.addr %s132, 8
      %s134 = scalar_lea.vmem %s0, %s133
      %p135 = scmp.lt.s32.totalorder %s13, 1
      %s136 = scalar_select %p135, %s13, 1
      %s137 = smul.addr %s136, 8
      %s138 = scalar_lea.vmem %s2, %s137
      %v139 = vld [vmem:[%s134] sm:$0x3f]
      %v140 = vld [vmem:[%s1] sm:$0x3f]
      %v141 = vadd.f32 %v139, %v140
      %vm142 = vcmask 70656
      %143 = vst.msk [vmem:[%s138] sm:$0x3f] %vm142, %v141
      %p144 = scmp.lt.s32.totalorder %s13, 1
      %s145 = scalar_select %p144, %s13, 1
      %s146 = smul.addr %s145, 8
      %s147 = scalar_lea.vmem %s2, %s146
      // Predicated region
      $region29: #{tpu_custom_call.1} parent=27 // pred_check
        %p148 = pneg %p78
      $region30: #{tpu_custom_call.1} parent=27 // pred_check_branch
        %150 = sbr.rel (%p148) target = $region32
      $region31: #{tpu_custom_call.1} parent=27 // pred_region
        _
      $region32: #{tpu_custom_call.1} parent=27 // pred_fallthru
        _
    $region28: #{tpu_custom_call.1} parent=5 // pred_fallthru
      _
    %p151 = scmp.le.s32.totalorder 2, %s8
    // Predicated region
    $region33: #{tpu_custom_call.1} parent=5 // pred_check
      %p152 = pneg %p151
    $region34: #{tpu_custom_call.1} parent=5 // pred_check_branch
      %154 = sbr.rel (%p152) target = $region36
    $region35: #{tpu_custom_call.1} parent=5 // pred_region
      %s155 = ssub.s32 %s8, 2
      // Predicated region
      $region37: #{tpu_custom_call.1} parent=35 // pred_check
        %p156 = pneg %p84
      $region38: #{tpu_custom_call.1} parent=35 // pred_check_branch
        %158 = sbr.rel (%p156) target = $region40
      $region39: #{tpu_custom_call.1} parent=35 // pred_region
        %p159 = scmp.lt.s32.totalorder %s14, 1
        %s160 = scalar_select %p159, %s14, 1
        %s161 = smul.addr %s160, 8
        %s162 = scalar_lea.vmem %s2, %s161
      $region40: #{tpu_custom_call.1} parent=35 // pred_fallthru
        _
    $region36: #{tpu_custom_call.1} parent=5 // pred_fallthru
      _
  $region6: #{tpu_custom_call.1} parent=0 // loop_footer
    %s12 = sadd.s32 1, %s8
  $region7: #{tpu_custom_call.1} parent=0 // loop_footer_branch
    %7 = sbr.rel target = $region3
  $region8: #{tpu_custom_call.1} parent=0 // loop_exit
    _

</llo_original>
